<compile_context>
chip_gen: v5e
topology: v5e:2x2
jax: 0.10.0
libtpu: 0.0.40
codegen_flags: <defaults>
</compile_context>

<pallas_src>
import math
import functools

import jax
import jax.numpy as jnp
from jax.experimental import pallas as pl
from jax.experimental.pallas import tpu as pltpu


# ----------------------------------------------------------------------------
# Parameter / buffer setup (glue, mirrors torch __init__)
# ----------------------------------------------------------------------------
def make_pe_table(max_len: int, d_model: int, dtype=jnp.float32) -> jnp.ndarray:
    """pe[pos, 2i] = sin(pos * w_i), pe[pos, 2i+1] = cos(pos * w_i)."""
    position = jnp.arange(max_len, dtype=jnp.float32)[:, None]              # (L, 1)
    div_term = jnp.exp(
        jnp.arange(0, d_model, 2, dtype=jnp.float32) * (-math.log(10000.0) / d_model)
    )                                                                        # (D/2,)
    pe = jnp.zeros((max_len, d_model), dtype=jnp.float32)
    pe = pe.at[:, 0::2].set(jnp.sin(position * div_term))
    pe = pe.at[:, 1::2].set(jnp.cos(position * div_term))
    return pe.astype(dtype)                                                  # (L, D)


# ----------------------------------------------------------------------------
# Kernels (x / out presented as lane-dense (seq_tile, B*D) blocks)
# ----------------------------------------------------------------------------
def _pe_rows(pe_ref, *, seq_tile, batch, pe_is_full):
    """(seq_tile, B*D) positional-encoding slab for the current grid step."""
    if pe_is_full:
        # pe held resident in VMEM as one (S, D) block -> slice this tile's rows.
        start = pl.program_id(0) * seq_tile
        pe = pe_ref[pl.ds(start, seq_tile), :]          # (seq_tile, D)
    else:
        pe = pe_ref[...]                                # per-tile (seq_tile, D) block
    # Broadcast over the batch axis: the row-major (S, B, D) -> (S, B*D) view of x
    # means each row is B contiguous copies of the D features, so repeat pe along lanes.
    return jnp.tile(pe, (1, batch))                     # (seq_tile, B*D)


def pe_add_kernel(x_ref, pe_ref, o_ref, *, seq_tile, batch, pe_is_full):
    """Eval-mode forward: out = x + pe (dropout is identity at eval)."""
    pe = _pe_rows(pe_ref, seq_tile=seq_tile, batch=batch, pe_is_full=pe_is_full)
    o_ref[...] = x_ref[...] + pe.astype(x_ref.dtype)


def pe_add_dropout_kernel(x_ref, pe_ref, bits_ref, o_ref, *,
                          seq_tile, batch, pe_is_full, drop_p):
    """Train-mode forward: out = inverted_dropout(x + pe, p=drop_p)."""
    pe = _pe_rows(pe_ref, seq_tile=seq_tile, batch=batch, pe_is_full=pe_is_full)
    y = x_ref[...] + pe.astype(x_ref.dtype)
    # keep iff uniform32 >= thresh  (drop with probability p), fused select+scale.
    thresh = jnp.uint32(min(int(round(drop_p * 2.0 ** 32)), 2 ** 32 - 1))
    scale = jnp.asarray(1.0 / (1.0 - drop_p), y.dtype)
    o_ref[...] = jnp.where(bits_ref[...] >= thresh, y * scale, jnp.zeros_like(y))


# ----------------------------------------------------------------------------
# Wrapper
# ----------------------------------------------------------------------------
_TARGET_BLOCK_BYTES = 1 << 20      # ~1 MiB per x/out block: big enough to amortize
                                   # per-step overhead, small enough for v7x VMEM.
_PE_RESIDENT_MAX_BYTES = 4 << 20   # hold the full pe slice in VMEM below this size.


def _choose_seq_tile(S: int, row_bytes: int) -> int:
    """Largest multiple-of-8 divisor of S whose block stays near the byte target."""
    if S % 8 != 0:
        return S                   # full-extent block (allowed by the (8,128) rule)
    max_rows = max(8, (_TARGET_BLOCK_BYTES // max(row_bytes, 1)) // 8 * 8)
    best, t = 8, 8
    while t <= min(S, max_rows):
        if S % t == 0:
            best = t
        t += 8
    return best


def _compiler_params(vmem_need_bytes: int) -> pltpu.CompilerParams:
    # Generous headroom, but capped at 32 MiB so it is valid on v7x's 64 MiB VMEM.
    limit = int(min(max(2 * vmem_need_bytes, 16 << 20), 32 << 20))
    return pltpu.CompilerParams(
        dimension_semantics=("parallel",),   # grid steps independent (also train path)
        vmem_limit_bytes=limit,
    )


def positional_encoding_fwd(
    x: jnp.ndarray,
    pe_full: jnp.ndarray,
    *,
    dropout_p: float = 0.1,
    training: bool = False,
    rng_key=None,
) -> jnp.ndarray:
    """x: (S, B, D), pe_full: (max_len, D).  Returns (S, B, D)."""
    S, B, D = x.shape
    assert pe_full.shape[0] >= S and pe_full.shape[1] == D

    itemsize = jnp.dtype(x.dtype).itemsize
    lanes = B * D
    row_bytes = lanes * itemsize
    seq_tile = _choose_seq_tile(S, row_bytes)
    grid = (S // seq_tile,)

    x2 = x.reshape(S, lanes)                 # free row-major view, lane-dense output
    pe_s = pe_full[:S]                       # (S, D) slice (glue)
    pe_itemsize = jnp.dtype(pe_s.dtype).itemsize
    pe_bytes = S * D * pe_itemsize
    pe_is_full = pe_bytes <= _PE_RESIDENT_MAX_BYTES

    x_spec = pl.BlockSpec((seq_tile, lanes), lambda i: (i, 0))
    out_spec = pl.BlockSpec((seq_tile, lanes), lambda i: (i, 0))
    if pe_is_full:
        pe_spec = pl.BlockSpec((S, D), lambda i: (0, 0))        # resident in VMEM
        pe_blk = pe_bytes
    else:
        pe_spec = pl.BlockSpec((seq_tile, D), lambda i: (i, 0))
        pe_blk = seq_tile * D * pe_itemsize

    out_shape = jax.ShapeDtypeStruct((S, lanes), x.dtype)
    blk = seq_tile * lanes * itemsize

    if not training:
        kernel = functools.partial(
            pe_add_kernel, seq_tile=seq_tile, batch=B, pe_is_full=pe_is_full)
        out2 = pl.pallas_call(
            kernel,
            out_shape=out_shape,
            grid=grid,
            in_specs=[x_spec, pe_spec],
            out_specs=out_spec,
            compiler_params=_compiler_params(4 * blk + 2 * pe_blk),
            cost_estimate=pl.CostEstimate(
                flops=S * B * D,
                transcendentals=0,
                bytes_accessed=2 * S * lanes * itemsize + pe_bytes),
        )(x2, pe_s)
        return out2.reshape(S, B, D)

    assert 0.0 <= dropout_p < 1.0, "train-mode dropout requires 0 <= p < 1"
    # TODO(synk): dropout bits come from host-side jax.random (thresholded
    # in-kernel); the in-kernel TPU hardware PRNG (pltpu.prng_*) has no
    # CPU/interpret lowering, and neither stream bit-matches torch's RNG.
    if rng_key is None:
        rng_key = jax.random.PRNGKey(0)
    bits = jax.random.bits(rng_key, (S, lanes), dtype=jnp.uint32)
    bits_spec = pl.BlockSpec((seq_tile, lanes), lambda i: (i, 0))
    bits_blk = seq_tile * lanes * 4

    kernel = functools.partial(
        pe_add_dropout_kernel, seq_tile=seq_tile, batch=B,
        pe_is_full=pe_is_full, drop_p=float(dropout_p))
    out2 = pl.pallas_call(
        kernel,
        out_shape=out_shape,
        grid=grid,
        in_specs=[x_spec, pe_spec, bits_spec],
        out_specs=out_spec,
        compiler_params=_compiler_params(4 * blk + 2 * pe_blk + 2 * bits_blk),
        cost_estimate=pl.CostEstimate(
            flops=3 * S * B * D,
            transcendentals=0,
            bytes_accessed=2 * S * lanes * itemsize + pe_bytes + S * lanes * 4),
    )(x2, pe_s, bits)
    return out2.reshape(S, B, D)


# ----------------------------------------------------------------------------
# Main
# ----------------------------------------------------------------------------
if __name__ == "__main__":
    S, B, D = 8, 2, 32          # seq_len, batch, d_model
    MAX_LEN = 5000
    DROP_P = 0.1

    key = jax.random.PRNGKey(0)
    kx, kdrop = jax.random.split(key)
    x = jax.random.normal(kx, (S, B, D), dtype=jnp.float32)
    pe_full = make_pe_table(MAX_LEN, D, dtype=jnp.float32)

    # Eval-mode (dropout == identity): check against pure-JAX reference.
    out_eval = jax.block_until_ready(
        positional_encoding_fwd(x, pe_full, dropout_p=DROP_P, training=False))
    ref_eval = x + pe_full[:S][:, None, :]
    assert out_eval.shape == (S, B, D) and out_eval.dtype == jnp.float32
    assert jnp.allclose(out_eval, ref_eval, atol=1e-6, rtol=1e-6), "eval mismatch"

    # Train-mode (inverted dropout): every element is either 0 (dropped) or the
    # scaled sum (kept).
    out_train = jax.block_until_ready(
        positional_encoding_fwd(x, pe_full, dropout_p=DROP_P, training=True,
                                rng_key=kdrop))
    assert out_train.shape == (S, B, D)
    scaled = ref_eval / (1.0 - DROP_P)
    is_zero = jnp.isclose(out_train, 0.0, atol=1e-6)
    is_scaled = jnp.isclose(out_train, scaled, atol=1e-5, rtol=1e-5)
    assert bool(jnp.all(is_zero | is_scaled)), "train dropout semantics mismatch"

    print("KERNEL_OK")
</pallas_src>

<mosaic_0001>
module attributes {stable_mosaic.version = 11 : i64} {
  func.func @pe_add_kernel(%arg0: i32, %arg1: memref<8x64xf32, #tpu.memory_space<vmem>>, %arg2: memref<8x32xf32, #tpu.memory_space<vmem>>, %arg3: memref<8x64xf32, #tpu.memory_space<vmem>>) attributes {dimension_semantics = [#tpu.dimension_semantics<parallel>], iteration_bounds = array<i64: 1>, scalar_prefetch = 0 : i64, scratch_operands = 0 : i64, tpu.core_type = #tpu.core_type<tc>, window_params = [{transform_indices = @transform_0, window_bounds = array<i64: 8, 64>}, {pipeline_mode = #tpu.pipeline_mode<synchronous>, transform_indices = @transform_1, window_bounds = array<i64: 8, 32>}, {transform_indices = @transform_2, window_bounds = array<i64: 8, 64>}]} {
    %c8_i32 = arith.constant 8 : i32
    %0 = arith.muli %arg0, %c8_i32 : i32
    %1 = arith.index_cast %0 : i32 to index
    %c0 = arith.constant 0 : index
    %2 = vector.load %arg2[%1, %c0] : memref<8x32xf32, #tpu.memory_space<vmem>>, vector<8x32xf32>
    %3 = tpu.concatenate %2, %2 in 1 : vector<8x32xf32>, vector<8x32xf32> -> vector<8x64xf32>
    %c0_0 = arith.constant 0 : index
    %c0_1 = arith.constant 0 : index
    %4 = vector.load %arg1[%c0_0, %c0_1] : memref<8x64xf32, #tpu.memory_space<vmem>>, vector<8x64xf32>
    %5 = arith.addf %4, %3 : vector<8x64xf32>
    %c0_2 = arith.constant 0 : index
    %c0_3 = arith.constant 0 : index
    %6 = vector.load %arg3[%c0_2, %c0_3] : memref<8x64xf32, #tpu.memory_space<vmem>>, vector<8x64xf32>
    tpu.vector_store %arg3[%c0_2, %c0_3], %5 {strides = array<i32>} : memref<8x64xf32, #tpu.memory_space<vmem>>, vector<8x64xf32>,
    return
  }
  func.func @transform_0(%arg0: i32) -> (i32, i32) {
    %c0_i32 = arith.constant 0 : i32
    %c0_i32_0 = arith.constant 0 : i32
    return %arg0, %c0_i32 : i32, i32
  }
  func.func @transform_1(%arg0: i32) -> (i32, i32) {
    %c0_i32 = arith.constant 0 : i32
    %c0_i32_0 = arith.constant 0 : i32
    %c0_i32_1 = arith.constant 0 : i32
    return %c0_i32, %c0_i32_0 : i32, i32
  }
  func.func @transform_2(%arg0: i32) -> (i32, i32) {
    %c0_i32 = arith.constant 0 : i32
    %c0_i32_0 = arith.constant 0 : i32
    return %arg0, %c0_i32 : i32, i32
  }
}

</mosaic_0001>

<llo_original>
// kernel: tpu_custom_call.1
$region0: #{tpu_custom_call.1}
  #allocation0 [shape = 'u32[]', space=smem, size = 0x4, offset = 0x4, fixed_abs, tag = 'smem constant byte address 0x4 - core index']
  #allocation1 [shape = 'u32[72,128]{1,0:T(1,128)}', space=vmem, size = 0x9000, scoped, tag = 'internal scratch']
  %s0 = inlined_call_operand.hbm [shape: f32[8,64], index: 0, kind: input, shape index: {}]
  %s1 = inlined_call_operand.hbm [shape: f32[8,32], index: 1, kind: input, shape index: {}]
  %s2 = inlined_call_operand.hbm [shape: f32[8,64], index: 2, kind: output, shape index: {}]
  %s3 = sld [smem:[#allocation0]]
  $region26: #{tpu_custom_call.1} parent=0
    _
  %s5 = ssub.s32 1, %s3
  %s6 = scalar_select 0, %s5, %s3
  $region1: #{tpu_custom_call.1} parent=0
    #allocation2 [shape = 'u8[4096]{0}', space=vmem, size = 0x1000, scoped, tag = 'input window, operand 0, single buffered']
    #allocation3 [shape = 's32[1]{0}', space=sflag, size = 0x4, scoped, tag = 'scoped memory for tpu_custom_call.1']
    #allocation4 [shape = 's32[1]{0}', space=sflag, size = 0x4, scoped, tag = 'scoped memory for tpu_custom_call.1']
    #allocation5 [shape = 'u8[4096]{0}', space=vmem, size = 0x1000, scoped, tag = 'input window, operand 1, single buffered']
    #allocation6 [shape = 's32[1]{0}', space=sflag, size = 0x4, scoped, tag = 'scoped memory for tpu_custom_call.1']
    #allocation7 [shape = 'u8[4096]{0}', space=vmem, size = 0x1000, scoped, tag = 'output window, operand 0, single buffered']
    %7 = vsyncpa [#allocation3], 0
    %8 = vsyncpa [#allocation6], 0
    %9 = vsyncpa [#allocation4], 0
    // Predicated region
    $region2: #{tpu_custom_call.1} parent=1 // pred_check
      _
    $region3: #{tpu_custom_call.1} parent=1 // pred_check_branch
      %11 = sbr.rel (0) target = $region5
    $region4: #{tpu_custom_call.1} parent=1 // pred_region
      %13 = vsyncadd [#allocation3], 0
      %s15 = sshll.u32 %s0, 4
      %s16 = int_to_ptr.hbm [resolvable:$true] %s15
      %s17 = sshll.u32 [#allocation2], 4
      %s18 = int_to_ptr.vmem [resolvable:$true] %s17
      %20 = dma.hbm_to_vmem [thread:$0]  %s16, 128, %s18, [#allocation3]
    $region5: #{tpu_custom_call.1} parent=1 // pred_fallthru
      _
    // Predicated region
    $region6: #{tpu_custom_call.1} parent=1 // pred_check
      _
    $region7: #{tpu_custom_call.1} parent=1 // pred_check_branch
      %22 = sbr.rel (0) target = $region9
    $region8: #{tpu_custom_call.1} parent=1 // pred_region
      %24 = vsyncadd [#allocation6], 0
      %s26 = sshll.u32 %s1, 4
      %s27 = int_to_ptr.hbm [resolvable:$true] %s26
      %s28 = sshll.u32 [#allocation5], 4
      %s29 = int_to_ptr.vmem [resolvable:$true] %s28
      %31 = dma.hbm_to_vmem [thread:$0]  %s27, 128, %s29, [#allocation6]
    $region9: #{tpu_custom_call.1} parent=1 // pred_fallthru
      _
    // Predicated region
    $region10: #{tpu_custom_call.1} parent=1 // pred_check
      _
    $region11: #{tpu_custom_call.1} parent=1 // pred_check_branch
      %33 = sbr.rel (0) target = $region13
    $region12: #{tpu_custom_call.1} parent=1 // pred_region
      %35 = dma.done [#allocation3], 128
    $region13: #{tpu_custom_call.1} parent=1 // pred_fallthru
      _
    // Predicated region
    $region14: #{tpu_custom_call.1} parent=1 // pred_check
      _
    $region15: #{tpu_custom_call.1} parent=1 // pred_check_branch
      %37 = sbr.rel (0) target = $region17
    $region16: #{tpu_custom_call.1} parent=1 // pred_region
      %39 = dma.done [#allocation6], 128
    $region17: #{tpu_custom_call.1} parent=1 // pred_fallthru
      _
    %s40 = smul.u32 0, 8
    %s41 = scalar_lea.vmem [#allocation5], %s40
    %v42 = vld [vmem:[%s41] sm:$0xff]
    %44 = vrot.lane.b32.xlu0 %v42, 32
    %v45 = vpop.permute.xlu0 %44
    %vm47 = vcmask 261120
    %v48 = vsel %vm47, %v42, %v45
    %v49 = vld [vmem:[#allocation2] sm:$0xff]
    %v50 = vadd.f32 %v49, %v48
    %vm51 = vcmask 523264
    %52 = vst.msk [vmem:[#allocation7] sm:$0xff] %vm51, %v50
    // Predicated region
    $region18: #{tpu_custom_call.1} parent=1 // pred_check
      _
    $region19: #{tpu_custom_call.1} parent=1 // pred_check_branch
      %54 = sbr.rel (0) target = $region21
    $region20: #{tpu_custom_call.1} parent=1 // pred_region
      %56 = vsyncadd [#allocation4], 0
      %s58 = sshll.u32 [#allocation7], 4
      %s59 = int_to_ptr.vmem [resolvable:$true] %s58
      %s60 = sshll.u32 %s2, 4
      %s61 = int_to_ptr.hbm [resolvable:$true] %s60
      %63 = dma.vmem_to_hbm [thread:$0]  %s59, 128, %s61, [#allocation4]
    $region21: #{tpu_custom_call.1} parent=1 // pred_fallthru
      _
    // Predicated region
    $region22: #{tpu_custom_call.1} parent=1 // pred_check
      _
    $region23: #{tpu_custom_call.1} parent=1 // pred_check_branch
      %65 = sbr.rel (0) target = $region25
    $region24: #{tpu_custom_call.1} parent=1 // pred_region
      %67 = dma.done [#allocation4], 128
    $region25: #{tpu_custom_call.1} parent=1 // pred_fallthru
      _
    %68 = vsyncpa [#allocation3], 1
    %69 = vsyncpa [#allocation6], 1
    %70 = vsyncpa [#allocation4], 1

</llo_original>
